<compile_context>
chip_gen: v7x
topology: tpu7x:2x2x1
jax: 0.10.0
libtpu: 0.0.40
codegen_flags: <defaults>
</compile_context>

<pallas_src>
import math
import jax
import jax.numpy as jnp
from jax.experimental import pallas as pl
from jax.experimental.pallas import tpu as pltpu

LOG_MAX_STD = 2.0
LOG_MIN_STD = -20.0
_HALF_LOG_2PI = 0.5 * math.log(2.0 * math.pi)


def adversary_kernel(x_ref, w1_ref, b1_ref, w2_ref, b2_ref,
                     wh_ref, bh_ref, eps_ref, out_ref):
    obs = eps_ref.shape[-1]
    mm_dtype = w1_ref.dtype

    x = x_ref[...].astype(mm_dtype)

    # fc1 + relu  (bf16 operands, f32 accumulation)
    h = jnp.dot(x, w1_ref[...], preferred_element_type=jnp.float32) + b1_ref[...]
    h = jnp.maximum(h, 0.0)

    # fc2 + relu
    h = jnp.dot(h.astype(mm_dtype), w2_ref[...],
                preferred_element_type=jnp.float32) + b2_ref[...]
    h = jnp.maximum(h, 0.0)

    # fused heads: one (hidden, 2*obs) matmul -> [mu | log_std]
    y = jnp.dot(h.astype(mm_dtype), wh_ref[...],
                preferred_element_type=jnp.float32) + bh_ref[...]
    mu = y[:, :obs]
    log_std = jnp.clip(y[:, obs:], LOG_MIN_STD, LOG_MAX_STD)
    std = jnp.exp(log_std)

    # reparameterized sample (matches Normal(mu, std).sample())
    eps = eps_ref[...]
    acts = mu + std * eps

    # Normal log_prob(acts): since acts - mu == std*eps,
    #   -(acts-mu)^2/(2 std^2) - log(std) - 0.5*log(2*pi) == -0.5*eps^2 - log_std - c
    log_prob = -0.5 * (eps * eps) - log_std - _HALF_LOG_2PI

    out_ref[...] = jnp.concatenate([acts, log_prob], axis=-1)


def pack_params(w1, b1, w2, b2, wmu, bmu, wls, bls, matmul_dtype=jnp.bfloat16):
    """Fuse the two heads and cast matmul operands (weights) to matmul_dtype.

    Biases stay f32 (added after the f32-accumulated dot)."""
    wh = jnp.concatenate([wmu, wls], axis=1)
    bh = jnp.concatenate([bmu, bls], axis=1)
    return (w1.astype(matmul_dtype), b1.astype(jnp.float32),
            w2.astype(matmul_dtype), b2.astype(jnp.float32),
            wh.astype(matmul_dtype), bh.astype(jnp.float32))


def adversary_forward(x, packed_params, eps, *, block_b=256):
    """x: (B, obs_dim + num_dynamics + 1) f32; eps: (B, obs_dim) f32.

    Returns (acts, log_prob), each (B, obs_dim) f32."""
    w1, b1, w2, b2, wh, bh = packed_params
    B, in_dim = x.shape
    obs_dim = eps.shape[1]
    out_dim = 2 * obs_dim

    # Batch tile: multiple of 8 (sublane) for the tiled case, or the full batch
    # if it already fits in one block. block_b=256 keeps the pipelined
    # footprint tiny even on v7x's smaller VMEM while amortizing per-step cost.
    if B <= block_b:
        TB = B
        xb, epsb = x, eps
    else:
        TB = block_b  # multiple of 8
        Bp = ((B + TB - 1) // TB) * TB
        pad = Bp - B
        xb = jnp.pad(x, ((0, pad), (0, 0)))
        epsb = jnp.pad(eps, ((0, pad), (0, 0)))
    Bp = xb.shape[0]
    grid = (Bp // TB,)

    def batch_tile(shape_cols):
        return pl.BlockSpec((TB, shape_cols), lambda i: (i, 0))

    def resident(arr):
        # Whole array, same block every grid step -> loaded once, stays in VMEM.
        return pl.BlockSpec(arr.shape, lambda i: (0, 0))

    out = pl.pallas_call(
        adversary_kernel,
        out_shape=jax.ShapeDtypeStruct((Bp, out_dim), jnp.float32),
        grid=grid,
        in_specs=[
            batch_tile(in_dim),      # x
            resident(w1), resident(b1),
            resident(w2), resident(b2),
            resident(wh), resident(bh),
            batch_tile(obs_dim),     # eps
        ],
        out_specs=batch_tile(out_dim),
        compiler_params=pltpu.CompilerParams(
            dimension_semantics=("parallel",)),
    )(xb, w1, b1, w2, b2, wh, bh, epsb)

    out = out[:B]
    return out[:, :obs_dim], out[:, obs_dim:]


def adversary_reference(x, packed_params, eps):
    """Pure-JAX reference with the same bf16-operand / f32-accumulate math."""
    w1, b1, w2, b2, wh, bh = packed_params
    mm = w1.dtype
    obs = eps.shape[1]
    h = jnp.maximum(
        jnp.dot(x.astype(mm), w1, preferred_element_type=jnp.float32) + b1, 0.0)
    h = jnp.maximum(
        jnp.dot(h.astype(mm), w2, preferred_element_type=jnp.float32) + b2, 0.0)
    y = jnp.dot(h.astype(mm), wh, preferred_element_type=jnp.float32) + bh
    mu = y[:, :obs]
    log_std = jnp.clip(y[:, obs:], LOG_MIN_STD, LOG_MAX_STD)
    std = jnp.exp(log_std)
    acts = mu + std * eps
    log_prob = -0.5 * (eps * eps) - log_std - _HALF_LOG_2PI
    return acts, log_prob


def init_linear(key, fan_in, fan_out):
    """Deterministic init matching nn.Linear's U(-1/sqrt(fan_in), 1/sqrt(fan_in))."""
    kw, kb = jax.random.split(key)
    bound = 1.0 / math.sqrt(fan_in)
    w = jax.random.uniform(kw, (fan_in, fan_out), jnp.float32, -bound, bound)
    b = jax.random.uniform(kb, (1, fan_out), jnp.float32, -bound, bound)
    return w, b


if __name__ == "__main__":
    # Small, TPU-friendly sizes consistent with the module's __init__.
    obs_dim = 16
    num_dynamics = 15          # input dim = obs_dim + num_dynamics + 1 = 32
    hidden_dim = 128           # 128-aligned (module default 245 is MXU-ragged)
    batch = 8
    in_dim = obs_dim + num_dynamics + 1

    root = jax.random.PRNGKey(0)
    k_x, k_eps, k1, k2, k3, k4 = jax.random.split(root, 6)

    w1, b1 = init_linear(k1, in_dim, hidden_dim)
    w2, b2 = init_linear(k2, hidden_dim, hidden_dim)
    wmu, bmu = init_linear(k3, hidden_dim, obs_dim)
    wls, bls = init_linear(k4, hidden_dim, obs_dim)
    params = pack_params(w1, b1, w2, b2, wmu, bmu, wls, bls,
                         matmul_dtype=jnp.bfloat16)

    x = jax.random.normal(k_x, (batch, in_dim), jnp.float32)
    eps = jax.random.normal(k_eps, (batch, obs_dim), jnp.float32)

    acts, log_prob = adversary_forward(x, params, eps)
    jax.block_until_ready((acts, log_prob))

    assert acts.shape == (batch, obs_dim)
    assert log_prob.shape == (batch, obs_dim)
    assert bool(jnp.all(jnp.isfinite(acts))) and bool(jnp.all(jnp.isfinite(log_prob)))

    # Compare against a pure-JAX reference with identical dtype policy.
    ref_acts, ref_logp = adversary_reference(x, params, eps)
    assert bool(jnp.allclose(acts, ref_acts, rtol=1e-2, atol=1e-2))
    assert bool(jnp.allclose(log_prob, ref_logp, rtol=1e-2, atol=1e-2))

    print("KERNEL_OK")
</pallas_src>

<mosaic_0001>
module attributes {stable_mosaic.version = 11 : i64} {
  func.func @adversary_kernel(%arg0: i32, %arg1: memref<8x32xf32, #tpu.memory_space<vmem>>, %arg2: memref<32x128xbf16, #tpu.memory_space<vmem>>, %arg3: memref<1x128xf32, #tpu.memory_space<vmem>>, %arg4: memref<128x128xbf16, #tpu.memory_space<vmem>>, %arg5: memref<1x128xf32, #tpu.memory_space<vmem>>, %arg6: memref<128x32xbf16, #tpu.memory_space<vmem>>, %arg7: memref<1x32xf32, #tpu.memory_space<vmem>>, %arg8: memref<8x16xf32, #tpu.memory_space<vmem>>, %arg9: memref<8x32xf32, #tpu.memory_space<vmem>>) attributes {dimension_semantics = [#tpu.dimension_semantics<parallel>], iteration_bounds = array<i64: 1>, scalar_prefetch = 0 : i64, scratch_operands = 0 : i64, tpu.core_type = #tpu.core_type<tc>, window_params = [{transform_indices = @transform_0, window_bounds = array<i64: 8, 32>}, {pipeline_mode = #tpu.pipeline_mode<synchronous>, transform_indices = @transform_1, window_bounds = array<i64: 32, 128>}, {pipeline_mode = #tpu.pipeline_mode<synchronous>, transform_indices = @transform_2, window_bounds = array<i64: 1, 128>}, {pipeline_mode = #tpu.pipeline_mode<synchronous>, transform_indices = @transform_3, window_bounds = array<i64: 128, 128>}, {pipeline_mode = #tpu.pipeline_mode<synchronous>, transform_indices = @transform_4, window_bounds = array<i64: 1, 128>}, {pipeline_mode = #tpu.pipeline_mode<synchronous>, transform_indices = @transform_5, window_bounds = array<i64: 128, 32>}, {pipeline_mode = #tpu.pipeline_mode<synchronous>, transform_indices = @transform_6, window_bounds = array<i64: 1, 32>}, {transform_indices = @transform_7, window_bounds = array<i64: 8, 16>}, {transform_indices = @transform_8, window_bounds = array<i64: 8, 32>}]} {
    %c0 = arith.constant 0 : index
    %c0_0 = arith.constant 0 : index
    %0 = vector.load %arg1[%c0, %c0_0] : memref<8x32xf32, #tpu.memory_space<vmem>>, vector<8x32xf32>
    %1 = arith.truncf %0 : vector<8x32xf32> to vector<8x32xbf16>
    %c0_1 = arith.constant 0 : index
    %c0_2 = arith.constant 0 : index
    %2 = vector.load %arg2[%c0_1, %c0_2] : memref<32x128xbf16, #tpu.memory_space<vmem>>, vector<32x128xbf16>
    %cst = arith.constant dense<0.000000e+00> : vector<8x128xf32>
    %3 = tpu.matmul %1, %2, %cst {dimension_numbers = #tpu.dot_dimension_numbers<[1], [0], [0], [1], [0, 0, 1, 1], [], []>} : vector<8x32xbf16>, vector<32x128xbf16>, vector<8x128xf32> -> vector<8x128xf32>
    %c0_3 = arith.constant 0 : index
    %c0_4 = arith.constant 0 : index
    %4 = vector.load %arg3[%c0_3, %c0_4] : memref<1x128xf32, #tpu.memory_space<vmem>>, vector<1x128xf32>
    %5 = vector.broadcast %4 : vector<1x128xf32> to vector<8x128xf32>
    %6 = arith.addf %3, %5 : vector<8x128xf32>
    %cst_5 = arith.constant 0.000000e+00 : f32
    %7 = vector.broadcast %cst_5 : f32 to vector<8x128xf32>
    %8 = arith.maximumf %6, %7 : vector<8x128xf32>
    %9 = arith.truncf %8 : vector<8x128xf32> to vector<8x128xbf16>
    %c0_6 = arith.constant 0 : index
    %c0_7 = arith.constant 0 : index
    %10 = vector.load %arg4[%c0_6, %c0_7] : memref<128x128xbf16, #tpu.memory_space<vmem>>, vector<128x128xbf16>
    %cst_8 = arith.constant dense<0.000000e+00> : vector<8x128xf32>
    %11 = tpu.matmul %9, %10, %cst_8 {dimension_numbers = #tpu.dot_dimension_numbers<[1], [0], [0], [1], [0, 0, 1, 1], [], []>} : vector<8x128xbf16>, vector<128x128xbf16>, vector<8x128xf32> -> vector<8x128xf32>
    %c0_9 = arith.constant 0 : index
    %c0_10 = arith.constant 0 : index
    %12 = vector.load %arg5[%c0_9, %c0_10] : memref<1x128xf32, #tpu.memory_space<vmem>>, vector<1x128xf32>
    %13 = vector.broadcast %12 : vector<1x128xf32> to vector<8x128xf32>
    %14 = arith.addf %11, %13 : vector<8x128xf32>
    %cst_11 = arith.constant 0.000000e+00 : f32
    %15 = vector.broadcast %cst_11 : f32 to vector<8x128xf32>
    %16 = arith.maximumf %14, %15 : vector<8x128xf32>
    %17 = arith.truncf %16 : vector<8x128xf32> to vector<8x128xbf16>
    %c0_12 = arith.constant 0 : index
    %c0_13 = arith.constant 0 : index
    %18 = vector.load %arg6[%c0_12, %c0_13] : memref<128x32xbf16, #tpu.memory_space<vmem>>, vector<128x32xbf16>
    %cst_14 = arith.constant dense<0.000000e+00> : vector<8x32xf32>
    %19 = tpu.matmul %17, %18, %cst_14 {dimension_numbers = #tpu.dot_dimension_numbers<[1], [0], [0], [1], [0, 0, 1, 1], [], []>} : vector<8x128xbf16>, vector<128x32xbf16>, vector<8x32xf32> -> vector<8x32xf32>
    %c0_15 = arith.constant 0 : index
    %c0_16 = arith.constant 0 : index
    %20 = vector.load %arg7[%c0_15, %c0_16] : memref<1x32xf32, #tpu.memory_space<vmem>>, vector<1x32xf32>
    %21 = vector.broadcast %20 : vector<1x32xf32> to vector<8x32xf32>
    %22 = arith.addf %19, %21 : vector<8x32xf32>
    %23 = vector.extract_strided_slice %22 {offsets = [0, 0], sizes = [8, 16], strides = [1, 1]} : vector<8x32xf32> to vector<8x16xf32>
    %24 = vector.extract_strided_slice %22 {offsets = [0, 16], sizes = [8, 16], strides = [1, 1]} : vector<8x32xf32> to vector<8x16xf32>
    %cst_17 = arith.constant -2.000000e+01 : f32
    %cst_18 = arith.constant 2.000000e+00 : f32
    %25 = vector.broadcast %cst_17 : f32 to vector<8x16xf32>
    %26 = arith.maximumf %25, %24 : vector<8x16xf32>
    %27 = vector.broadcast %cst_18 : f32 to vector<8x16xf32>
    %28 = arith.minimumf %27, %26 : vector<8x16xf32>
    %29 = math.exp %28 : vector<8x16xf32>
    %c0_19 = arith.constant 0 : index
    %c0_20 = arith.constant 0 : index
    %30 = vector.load %arg8[%c0_19, %c0_20] : memref<8x16xf32, #tpu.memory_space<vmem>>, vector<8x16xf32>
    %31 = arith.mulf %29, %30 : vector<8x16xf32>
    %32 = arith.addf %23, %31 : vector<8x16xf32>
    %33 = arith.mulf %30, %30 : vector<8x16xf32>
    %cst_21 = arith.constant -5.000000e-01 : f32
    %34 = vector.broadcast %cst_21 : f32 to vector<8x16xf32>
    %35 = arith.mulf %34, %33 : vector<8x16xf32>
    %36 = arith.subf %35, %28 : vector<8x16xf32>
    %cst_22 = arith.constant 0.918938517 : f32
    %37 = vector.broadcast %cst_22 : f32 to vector<8x16xf32>
    %38 = arith.subf %36, %37 : vector<8x16xf32>
    %39 = tpu.concatenate %32, %38 in 1 : vector<8x16xf32>, vector<8x16xf32> -> vector<8x32xf32>
    %c0_23 = arith.constant 0 : index
    %c0_24 = arith.constant 0 : index
    %40 = vector.load %arg9[%c0_23, %c0_24] : memref<8x32xf32, #tpu.memory_space<vmem>>, vector<8x32xf32>
    tpu.vector_store %arg9[%c0_23, %c0_24], %39 {strides = array<i32>} : memref<8x32xf32, #tpu.memory_space<vmem>>, vector<8x32xf32>,
    return
  }
  func.func @transform_0(%arg0: i32) -> (i32, i32) {
    %c0_i32 = arith.constant 0 : i32
    %c0_i32_0 = arith.constant 0 : i32
    return %arg0, %c0_i32 : i32, i32
  }
  func.func @transform_1(%arg0: i32) -> (i32, i32) {
    %c0_i32 = arith.constant 0 : i32
    %c0_i32_0 = arith.constant 0 : i32
    %c0_i32_1 = arith.constant 0 : i32
    return %c0_i32, %c0_i32_0 : i32, i32
  }
  func.func @transform_2(%arg0: i32) -> (i32, i32) {
    %c0_i32 = arith.constant 0 : i32
    %c0_i32_0 = arith.constant 0 : i32
    %c0_i32_1 = arith.constant 0 : i32
    return %c0_i32, %c0_i32_0 : i32, i32
  }
  func.func @transform_3(%arg0: i32) -> (i32, i32) {
    %c0_i32 = arith.constant 0 : i32
    %c0_i32_0 = arith.constant 0 : i32
    %c0_i32_1 = arith.constant 0 : i32
    return %c0_i32, %c0_i32_0 : i32, i32
  }
  func.func @transform_4(%arg0: i32) -> (i32, i32) {
    %c0_i32 = arith.constant 0 : i32
    %c0_i32_0 = arith.constant 0 : i32
    %c0_i32_1 = arith.constant 0 : i32
    return %c0_i32, %c0_i32_0 : i32, i32
  }
  func.func @transform_5(%arg0: i32) -> (i32, i32) {
    %c0_i32 = arith.constant 0 : i32
    %c0_i32_0 = arith.constant 0 : i32
    %c0_i32_1 = arith.constant 0 : i32
    return %c0_i32, %c0_i32_0 : i32, i32
  }
  func.func @transform_6(%arg0: i32) -> (i32, i32) {
    %c0_i32 = arith.constant 0 : i32
    %c0_i32_0 = arith.constant 0 : i32
    %c0_i32_1 = arith.constant 0 : i32
    return %c0_i32, %c0_i32_0 : i32, i32
  }
  func.func @transform_7(%arg0: i32) -> (i32, i32) {
    %c0_i32 = arith.constant 0 : i32
    %c0_i32_0 = arith.constant 0 : i32
    return %arg0, %c0_i32 : i32, i32
  }
  func.func @transform_8(%arg0: i32) -> (i32, i32) {
    %c0_i32 = arith.constant 0 : i32
    %c0_i32_0 = arith.constant 0 : i32
    return %arg0, %c0_i32 : i32, i32
  }
}

</mosaic_0001>

<llo_original>
// kernel: tpu_custom_call.1
$region0: #{tpu_custom_call.1}
  #allocation0 [shape = 'u32[]', space=smem, size = 0x4, offset = 0x4, fixed_abs, tag = 'smem constant byte address 0x4 - core index']
  #allocation1 [shape = 'u32[144,128]{1,0:T(1,128)}', space=vmem, size = 0x12000, scoped, tag = 'internal scratch']
  %s0 = inlined_call_operand.hbm [shape: f32[8,32], index: 0, kind: input, shape index: {}]
  %s1 = inlined_call_operand.vmem [shape: bf16[32,128], index: 1, kind: input, shape index: {}]
  %s2 = inlined_call_operand.vmem [shape: f32[1,128], index: 2, kind: input, shape index: {}]
  %s3 = inlined_call_operand.vmem [shape: bf16[128,128], index: 3, kind: input, shape index: {}]
  %s4 = inlined_call_operand.vmem [shape: f32[1,128], index: 4, kind: input, shape index: {}]
  %s5 = inlined_call_operand.vmem [shape: bf16[128,32], index: 5, kind: input, shape index: {}]
  %s6 = inlined_call_operand.hbm [shape: f32[1,32], index: 6, kind: input, shape index: {}]
  %s7 = inlined_call_operand.vmem [shape: f32[8,16], index: 7, kind: input, shape index: {}]
  %s8 = inlined_call_operand.hbm [shape: f32[8,32], index: 8, kind: output, shape index: {}]
  %s9 = sld [smem:[#allocation0]]
  $region50: #{tpu_custom_call.1} parent=0
    _
  %s11 = ssub.s32 1, %s9
  %s12 = scalar_select 0, %s11, %s9
  $region1: #{tpu_custom_call.1} parent=0
    #allocation2 [shape = 'u8[4096]{0}', space=vmem, size = 0x1000, scoped, tag = 'input window, operand 0, single buffered']
    #allocation3 [shape = 's32[1]{0}', space=sflag, size = 0x4, scoped, tag = 'scoped memory for tpu_custom_call.1']
    #allocation4 [shape = 's32[1]{0}', space=sflag, size = 0x4, scoped, tag = 'scoped memory for tpu_custom_call.1']
    #allocation5 [shape = 'u8[512]{0}', space=vmem, size = 0x400, scoped, tag = 'input window, operand 6, single buffered']
    #allocation6 [shape = 's32[1]{0}', space=sflag, size = 0x4, scoped, tag = 'scoped memory for tpu_custom_call.1']
    #allocation7 [shape = 'u8[4096]{0}', space=vmem, size = 0x1000, scoped, tag = 'output window, operand 0, single buffered']
    %13 = vsyncpa [#allocation3], 0
    %14 = vsyncpa [#allocation6], 0
    %15 = vsyncpa [#allocation4], 0
    // Predicated region
    $region2: #{tpu_custom_call.1} parent=1 // pred_check
      _
    $region3: #{tpu_custom_call.1} parent=1 // pred_check_branch
      %17 = sbr.rel (0) target = $region5
    $region4: #{tpu_custom_call.1} parent=1 // pred_region
      %s19 = ssub.s32 128, 128
      %20 = vsyncadd [#allocation3], %s19
      %s22 = sshll.u32 [#allocation2], 4
      %s23 = int_to_ptr.vmem [resolvable:$true] %s22
      %25 = dma.hbm_to_vmem [thread:$0]  %s0, 128, %s23, [#allocation3]
    $region5: #{tpu_custom_call.1} parent=1 // pred_fallthru
      _
    // Predicated region
    $region6: #{tpu_custom_call.1} parent=1 // pred_check
      _
    $region7: #{tpu_custom_call.1} parent=1 // pred_check_branch
      %27 = sbr.rel (0) target = $region9
    $region8: #{tpu_custom_call.1} parent=1 // pred_region
      _
    $region9: #{tpu_custom_call.1} parent=1 // pred_fallthru
      _
    // Predicated region
    $region10: #{tpu_custom_call.1} parent=1 // pred_check
      _
    $region11: #{tpu_custom_call.1} parent=1 // pred_check_branch
      %29 = sbr.rel (0) target = $region13
    $region12: #{tpu_custom_call.1} parent=1 // pred_region
      _
    $region13: #{tpu_custom_call.1} parent=1 // pred_fallthru
      _
    // Predicated region
    $region14: #{tpu_custom_call.1} parent=1 // pred_check
      _
    $region15: #{tpu_custom_call.1} parent=1 // pred_check_branch
      %31 = sbr.rel (0) target = $region17
    $region16: #{tpu_custom_call.1} parent=1 // pred_region
      _
    $region17: #{tpu_custom_call.1} parent=1 // pred_fallthru
      _
    // Predicated region
    $region18: #{tpu_custom_call.1} parent=1 // pred_check
      _
    $region19: #{tpu_custom_call.1} parent=1 // pred_check_branch
      %33 = sbr.rel (0) target = $region21
    $region20: #{tpu_custom_call.1} parent=1 // pred_region
      _
    $region21: #{tpu_custom_call.1} parent=1 // pred_fallthru
      _
    // Predicated region
    $region22: #{tpu_custom_call.1} parent=1 // pred_check
      _
    $region23: #{tpu_custom_call.1} parent=1 // pred_check_branch
      %35 = sbr.rel (0) target = $region25
    $region24: #{tpu_custom_call.1} parent=1 // pred_region
      _
    $region25: #{tpu_custom_call.1} parent=1 // pred_fallthru
      _
    // Predicated region
    $region26: #{tpu_custom_call.1} parent=1 // pred_check
      _
    $region27: #{tpu_custom_call.1} parent=1 // pred_check_branch
      %37 = sbr.rel (0) target = $region29
    $region28: #{tpu_custom_call.1} parent=1 // pred_region
      %s39 = ssub.s32 16, 16
      %40 = vsyncadd [#allocation6], %s39
      %s42 = sshll.u32 [#allocation5], 4
      %s43 = int_to_ptr.vmem [resolvable:$true] %s42
      %45 = dma.hbm_to_vmem [thread:$0]  %s6, 16, %s43, [#allocation6]
    $region29: #{tpu_custom_call.1} parent=1 // pred_fallthru
      _
    // Predicated region
    $region30: #{tpu_custom_call.1} parent=1 // pred_check
      _
    $region31: #{tpu_custom_call.1} parent=1 // pred_check_branch
      %47 = sbr.rel (0) target = $region33
    $region32: #{tpu_custom_call.1} parent=1 // pred_region
      _
    $region33: #{tpu_custom_call.1} parent=1 // pred_fallthru
      _
    // Predicated region
    $region34: #{tpu_custom_call.1} parent=1 // pred_check
      _
    $region35: #{tpu_custom_call.1} parent=1 // pred_check_branch
      %49 = sbr.rel (0) target = $region37
    $region36: #{tpu_custom_call.1} parent=1 // pred_region
      %50 = dma.done [#allocation3], 128
    $region37: #{tpu_custom_call.1} parent=1 // pred_fallthru
      _
    // Predicated region
    $region38: #{tpu_custom_call.1} parent=1 // pred_check
      _
    $region39: #{tpu_custom_call.1} parent=1 // pred_check_branch
      %52 = sbr.rel (0) target = $region41
    $region40: #{tpu_custom_call.1} parent=1 // pred_region
      %53 = dma.done [#allocation6], 16
    $region41: #{tpu_custom_call.1} parent=1 // pred_fallthru
      _
    %v55 = vld [vmem:[#allocation2] sm:$0xff]
    %v56 = vpack.c.bf16 %v55, %v55
    %v57 = vld [vmem:[%s1] sm:$0xf]
    %v58 = vld [vmem:[%s1 + $0x4] sm:$0xf]
    %v59 = vld [vmem:[%s1 + $0x8] sm:$0xf]
    %v60 = vld [vmem:[%s1 + $0xc] sm:$0xf]
    %v61 = vld [vmem:[%s2] sm:$0x1]
    %v63 = vlaneseq
    %v64 = vshrl.u32 %v63, 7
    %v65 = vsub.s32 0, %v64
    %v66 = vrot.slane %v61, %v65
    %v72 = vunpack.c.l.b16 %v57
    %v73 = vunpack.c.l.b16 %v58
    %v74 = vunpack.c.l.b16 %v59
    %v75 = vunpack.c.l.b16 %v60
    %v76 = vpack.c.b16 %v73, %v72
    %v77 = vpack.c.b16 %v75, %v74
    %vm80 = vcmask 261120
    %v82 = vsel %vm80, %v56, 0
    %84 = vmatprep.subr.bf16.mxu0 0
    %85 = vmatpush1.bf16.msra.mxu0 %v76
    %86 = vmatprep.subr.bf16.mxu0 0
    %87 = vmatpush1.bf16.msra.mxu0 %v77
    %88 = vmatprep.subr.bf16.mxu0 0
    %89 = vmatpush1.bf16.msra.mxu0 0
    %90 = vmatprep.subr.bf16.mxu0 0
    %91 = vmatpush1.bf16.msra.mxu0 0
    %92 = vmatprep.subr.bf16.mxu0 0
    %93 = vmatpush1.bf16.msra.mxu0 0
    %94 = vmatprep.subr.bf16.mxu0 0
    %95 = vmatpush1.bf16.msra.mxu0 0
    %96 = vmatprep.subr.bf16.mxu0 0
    %97 = vmatpush1.bf16.msra.mxu0 0
    %98 = vmatprep.subr.bf16.mxu0 0
    %99 = vmatpush1.bf16.msra.mxu0 0
    %100 = vmatprep.subr.bf16.mxu0 0
    %101 = vmatpush1.bf16.msra.mxu0 0
    %102 = vmatprep.subr.bf16.mxu0 0
    %103 = vmatpush1.bf16.msra.mxu0 0
    %104 = vmatprep.subr.bf16.mxu0 0
    %105 = vmatpush1.bf16.msra.mxu0 0
    %106 = vmatprep.subr.bf16.mxu0 0
    %107 = vmatpush1.bf16.msra.mxu0 0
    %108 = vmatprep.subr.bf16.mxu0 0
    %109 = vmatpush1.bf16.msra.mxu0 0
    %110 = vmatprep.subr.bf16.mxu0 0
    %111 = vmatpush1.bf16.msra.mxu0 0
    %112 = vmatprep.subr.bf16.mxu0 0
    %113 = vmatpush1.bf16.msra.mxu0 0
    %114 = vmatprep.subr.bf16.mxu0 0
    %115 = vmatpush1.bf16.msra.mxu0 0
    %116 = vmatprep.mubr.bf16.mxu0 0
    %117 = vmatmul.mubr.bf16.gmra.mrb[0].mxu0 %v82
    %v118 = vpop.f32.mrb[0].mxu0
    %v119 = vadd.f32 %v66, %v118
    %v120 = vpop.f32.mrb[0].mxu0
    %v121 = vpop.f32.mrb[0].mxu0
    %v122 = vpop.f32.mrb[0].mxu0
    %123 = vdwg.mxu0
    %v124 = vmax.f32 %v119, 0.0
    %v125 = vpack.c.bf16 %v124, %v124
    %v126 = vld [vmem:[%s3] sm:$0xf]
    %v127 = vld [vmem:[%s3 + $0x4] sm:$0xf]
    %v128 = vld [vmem:[%s3 + $0x8] sm:$0xf]
    %v129 = vld [vmem:[%s3 + $0xc] sm:$0xf]
    %v130 = vld [vmem:[%s3 + $0x10] sm:$0xf]
    %v131 = vld [vmem:[%s3 + $0x14] sm:$0xf]
    %v132 = vld [vmem:[%s3 + $0x18] sm:$0xf]
    %v133 = vld [vmem:[%s3 + $0x1c] sm:$0xf]
    %v134 = vld [vmem:[%s3 + $0x20] sm:$0xf]
    %v135 = vld [vmem:[%s3 + $0x24] sm:$0xf]
    %v136 = vld [vmem:[%s3 + $0x28] sm:$0xf]
    %v137 = vld [vmem:[%s3 + $0x2c] sm:$0xf]
    %v138 = vld [vmem:[%s3 + $0x30] sm:$0xf]
    %v139 = vld [vmem:[%s3 + $0x34] sm:$0xf]
    %v140 = vld [vmem:[%s3 + $0x38] sm:$0xf]
    %v141 = vld [vmem:[%s3 + $0x3c] sm:$0xf]
    %v142 = vld [vmem:[%s4] sm:$0x1]
    %v144 = vlaneseq
    %v145 = vshrl.u32 %v144, 7
    %v146 = vsub.s32 0, %v145
    %v147 = vrot.slane %v142, %v146
    %v165 = vunpack.c.l.b16 %v126
    %v166 = vunpack.c.l.b16 %v127
    %v167 = vunpack.c.l.b16 %v128
    %v168 = vunpack.c.l.b16 %v129
    %v169 = vunpack.c.l.b16 %v130
    %v170 = vunpack.c.l.b16 %v131
    %v171 = vunpack.c.l.b16 %v132
    %v172 = vunpack.c.l.b16 %v133
    %v173 = vunpack.c.l.b16 %v134
    %v174 = vunpack.c.l.b16 %v135
    %v175 = vunpack.c.l.b16 %v136
    %v176 = vunpack.c.l.b16 %v137
    %v177 = vunpack.c.l.b16 %v138
    %v178 = vunpack.c.l.b16 %v139
    %v179 = vunpack.c.l.b16 %v140
    %v180 = vunpack.c.l.b16 %v141
    %v181 = vpack.c.b16 %v166, %v165
    %v182 = vpack.c.b16 %v168, %v167
    %v183 = vpack.c.b16 %v170, %v169
    %v184 = vpack.c.b16 %v172, %v171
    %v185 = vpack.c.b16 %v174, %v173
    %v186 = vpack.c.b16 %v176, %v175
    %v187 = vpack.c.b16 %v178, %v177
    %v188 = vpack.c.b16 %v180, %v179
    %197 = vmatprep.subr.bf16.mxu0 0
    %198 = vmatpush1.bf16.msra.mxu0 %v181
    %199 = vmatprep.subr.bf16.mxu0 0
    %200 = vmatpush1.bf16.msra.mxu0 %v182
    %201 = vmatprep.subr.bf16.mxu0 0
    %202 = vmatpush1.bf16.msra.mxu0 %v183
    %203 = vmatprep.subr.bf16.mxu0 0
    %204 = vmatpush1.bf16.msra.mxu0 %v184
    %205 = vmatprep.subr.bf16.mxu0 0
    %206 = vmatpush1.bf16.msra.mxu0 %v185
    %207 = vmatprep.subr.bf16.mxu0 0
    %208 = vmatpush1.bf16.msra.mxu0 %v186
    %209 = vmatprep.subr.bf16.mxu0 0
    %210 = vmatpush1.bf16.msra.mxu0 %v187
    %211 = vmatprep.subr.bf16.mxu0 0
    %212 = vmatpush1.bf16.msra.mxu0 %v188
    %213 = vmatprep.subr.bf16.mxu0 0
    %214 = vmatpush1.bf16.msra.mxu0 0
    %215 = vmatprep.subr.bf16.mxu0 0
    %216 = vmatpush1.bf16.msra.mxu0 0
    %217 = vmatprep.subr.bf16.mxu0 0
    %218 = vmatpush1.bf16.msra.mxu0 0
    %219 = vmatprep.subr.bf16.mxu0 0
    %220 = vmatpush1.bf16.msra.mxu0 0
    %221 = vmatprep.subr.bf16.mxu0 0
    %222 = vmatpush1.bf16.msra.mxu0 0
    %223 = vmatprep.subr.bf16.mxu0 0
    %224 = vmatpush1.bf16.msra.mxu0 0
    %225 = vmatprep.subr.bf16.mxu0 0
    %226 = vmatpush1.bf16.msra.mxu0 0
    %227 = vmatprep.subr.bf16.mxu0 0
    %228 = vmatpush1.bf16.msra.mxu0 0
    %229 = vmatprep.mubr.bf16.mxu0 0
    %230 = vmatmul.mubr.bf16.gmra.mrb[0].mxu0 %v125
    %v231 = vpop.f32.mrb[0].mxu0
    %v232 = vadd.f32 %v147, %v231
    %v233 = vpop.f32.mrb[0].mxu0
    %v234 = vpop.f32.mrb[0].mxu0
    %v235 = vpop.f32.mrb[0].mxu0
    %236 = vdwg.mxu0
    %v237 = vmax.f32 %v232, 0.0
    %v238 = vpack.c.bf16 %v237, %v237
    %v239 = vld [vmem:[%s5] sm:$0xf]
    %v240 = vld [vmem:[%s5 + $0x4] sm:$0xf]
    %v241 = vld [vmem:[%s5 + $0x8] sm:$0xf]
    %v242 = vld [vmem:[%s5 + $0xc] sm:$0xf]
    %v243 = vld [vmem:[%s5 + $0x10] sm:$0xf]
    %v244 = vld [vmem:[%s5 + $0x14] sm:$0xf]
    %v245 = vld [vmem:[%s5 + $0x18] sm:$0xf]
    %v246 = vld [vmem:[%s5 + $0x1c] sm:$0xf]
    %v247 = vld [vmem:[%s5 + $0x20] sm:$0xf]
    %v248 = vld [vmem:[%s5 + $0x24] sm:$0xf]
    %v249 = vld [vmem:[%s5 + $0x28] sm:$0xf]
    %v250 = vld [vmem:[%s5 + $0x2c] sm:$0xf]
    %v251 = vld [vmem:[%s5 + $0x30] sm:$0xf]
    %v252 = vld [vmem:[%s5 + $0x34] sm:$0xf]
    %v253 = vld [vmem:[%s5 + $0x38] sm:$0xf]
    %v254 = vld [vmem:[%s5 + $0x3c] sm:$0xf]
    %v255 = vld [vmem:[#allocation5] sm:$0x1]
    %v257 = vlaneseq
    %v258 = vshrl.u32 %v257, 7
    %v259 = vsub.s32 0, %v258
    %v260 = vrot.slane %v255, %v259
    %v278 = vunpack.c.l.b16 %v239
    %v279 = vunpack.c.l.b16 %v240
    %v280 = vunpack.c.l.b16 %v241
    %v281 = vunpack.c.l.b16 %v242
    %v282 = vunpack.c.l.b16 %v243
    %v283 = vunpack.c.l.b16 %v244
    %v284 = vunpack.c.l.b16 %v245
    %v285 = vunpack.c.l.b16 %v246
    %v286 = vunpack.c.l.b16 %v247
    %v287 = vunpack.c.l.b16 %v248
    %v288 = vunpack.c.l.b16 %v249
    %v289 = vunpack.c.l.b16 %v250
    %v290 = vunpack.c.l.b16 %v251
    %v291 = vunpack.c.l.b16 %v252
    %v292 = vunpack.c.l.b16 %v253
    %v293 = vunpack.c.l.b16 %v254
    %v294 = vpack.c.b16 %v279, %v278
    %v295 = vpack.c.b16 %v281, %v280
    %v296 = vpack.c.b16 %v283, %v282
    %v297 = vpack.c.b16 %v285, %v284
    %v298 = vpack.c.b16 %v287, %v286
    %v299 = vpack.c.b16 %v289, %v288
    %v300 = vpack.c.b16 %v291, %v290
    %v301 = vpack.c.b16 %v293, %v292
    %310 = vmatprep.subr.bf16.mxu0 0
    %311 = vmatpush1.bf16.msra.mxu0 %v294
    %312 = vmatprep.subr.bf16.mxu0 0
    %313 = vmatpush1.bf16.msra.mxu0 %v295
    %314 = vmatprep.subr.bf16.mxu0 0
    %315 = vmatpush1.bf16.msra.mxu0 %v296
    %316 = vmatprep.subr.bf16.mxu0 0
    %317 = vmatpush1.bf16.msra.mxu0 %v297
    %318 = vmatprep.subr.bf16.mxu0 0
    %319 = vmatpush1.bf16.msra.mxu0 %v298
    %320 = vmatprep.subr.bf16.mxu0 0
    %321 = vmatpush1.bf16.msra.mxu0 %v299
    %322 = vmatprep.subr.bf16.mxu0 0
    %323 = vmatpush1.bf16.msra.mxu0 %v300
    %324 = vmatprep.subr.bf16.mxu0 0
    %325 = vmatpush1.bf16.msra.mxu0 %v301
    %326 = vmatprep.subr.bf16.mxu0 0
    %327 = vmatpush1.bf16.msra.mxu0 0
    %328 = vmatprep.subr.bf16.mxu0 0
    %329 = vmatpush1.bf16.msra.mxu0 0
    %330 = vmatprep.subr.bf16.mxu0 0
    %331 = vmatpush1.bf16.msra.mxu0 0
    %332 = vmatprep.subr.bf16.mxu0 0
    %333 = vmatpush1.bf16.msra.mxu0 0
    %334 = vmatprep.subr.bf16.mxu0 0
    %335 = vmatpush1.bf16.msra.mxu0 0
    %336 = vmatprep.subr.bf16.mxu0 0
    %337 = vmatpush1.bf16.msra.mxu0 0
    %338 = vmatprep.subr.bf16.mxu0 0
    %339 = vmatpush1.bf16.msra.mxu0 0
    %340 = vmatprep.subr.bf16.mxu0 0
    %341 = vmatpush1.bf16.msra.mxu0 0
    %342 = vmatprep.mubr.bf16.mxu0 0
    %343 = vmatmul.mubr.bf16.gmra.mrb[0].mxu0 %v238
    %v344 = vpop.f32.mrb[0].mxu0
    %v345 = vadd.f32 %v260, %v344
    %v346 = vpop.f32.mrb[0].mxu0
    %v347 = vpop.f32.mrb[0].mxu0
    %v348 = vpop.f32.mrb[0].mxu0
    %349 = vdwg.mxu0
    %v350 = vmax.f32 %v345, -20.0
    %v351 = vmin.f32 %v350, 2.0
    %v352 = vmul.f32 %v351, 1.442695
    %v353 = vpow.pop %v352
    %v354 = vld [vmem:[%s7] sm:$0xff]
    %356 = vrot.lane.b32.xlu0 %v354, 16
    %v357 = vpop.permute.xlu0 %356
    %v359 = vmul.f32 %v353, %v357
    %361 = vrot.lane.b32.xlu0 %v359, 112
    %v362 = vpop.permute.xlu0 %361
    %v364 = vadd.f32 %v345, %v362
    %v365 = vmul.f32 %v354, %v354
    %v366 = vmul.f32 %v365, -0.5
    %368 = vrot.lane.b32.xlu0 %v351, 112
    %v369 = vpop.permute.xlu0 %368
    %v371 = vsub.f32 %v366, %v369
    %v372 = vsub.f32 %v371, 0.9189385
    %374 = vrot.lane.b32.xlu0 %v372, 16
    %v375 = vpop.permute.xlu0 %374
    %vm377 = vcmask 130048
    %v378 = vsel %vm377, %v364, %v375
    %379 = vst.msk [vmem:[#allocation7] sm:$0xff] %vm80, %v378
    // Predicated region
    $region42: #{tpu_custom_call.1} parent=1 // pred_check
      _
    $region43: #{tpu_custom_call.1} parent=1 // pred_check_branch
      %381 = sbr.rel (0) target = $region45
    $region44: #{tpu_custom_call.1} parent=1 // pred_region
      %s383 = ssub.s32 128, 128
      %384 = vsyncadd [#allocation4], %s383
      %s386 = sshll.u32 [#allocation7], 4
      %s387 = int_to_ptr.vmem [resolvable:$true] %s386
      %389 = dma.vmem_to_hbm [thread:$0]  %s387, 128, %s8, [#allocation4]
    $region45: #{tpu_custom_call.1} parent=1 // pred_fallthru
      _
    // Predicated region
    $region46: #{tpu_custom_call.1} parent=1 // pred_check
      _
    $region47: #{tpu_custom_call.1} parent=1 // pred_check_branch
      %391 = sbr.rel (0) target = $region49
    $region48: #{tpu_custom_call.1} parent=1 // pred_region
      %392 = dma.done [#allocation4], 128
    $region49: #{tpu_custom_call.1} parent=1 // pred_fallthru
      _
    %393 = vsyncpa [#allocation3], 1
    %394 = vsyncpa [#allocation6], 1
    %395 = vsyncpa [#allocation4], 1

</llo_original>
